<compile_context>
chip_gen: v5e
topology: v5e:2x2
jax: 0.10.0
libtpu: 0.0.40
codegen_flags: <defaults>
</compile_context>

<pallas_src>
import numpy as np

import jax
import jax.numpy as jnp
from jax.experimental import pallas as pl
from jax.experimental.pallas import tpu as pltpu

LANE = 128
SUBLANE = 8

# ~4 MiB per streamed block, sized in bytes (dtype-aware row count).
TARGET_BLOCK_BYTES = 4 * 1024 * 1024
# 2 buffers x (in + out) x 4 MiB = 16 MiB live; 32 MiB limit gives headroom
# and is safe on every generation (v7x: 64 MiB physical per TensorCore).
VMEM_LIMIT_BYTES = 32 * 1024 * 1024
# Prefer at least this many grid steps so the "parallel" axis can shard
# across v7x's two TensorCores and double-buffering has work to overlap.
MIN_GRID_STEPS = 8


def _round_up(v, m):
    return (v + m - 1) // m * m


def smu_kernel(alpha_ref, mu_ref, x_ref, o_ref):
    # Scalar prep (scalar unit, free vs. the vector work):
    #   y = x * (c0 + c1 * erf(k * x))
    alpha = alpha_ref[0]
    mu = mu_ref[0]
    c0 = 0.5 * (1.0 + alpha)
    c1 = 0.5 * (1.0 - alpha)
    k = mu * (1.0 - alpha)

    x = x_ref[...]
    if x.dtype == jnp.float32:
        # f32 I/O: exact f32 math end to end.
        t = jax.lax.erf(k * x)
        o_ref[...] = x * (c0 + c1 * t)
    else:
        # 16-bit I/O (bf16 / f16): do the cheap multiplies/adds in the narrow
        # dtype (halves VALU issue count and vreg pressure on v6e/v7x); keep
        # only the erf core in f32.
        cd = x.dtype
        kx = x * k.astype(cd)
        t = jax.lax.erf(kx.astype(jnp.float32)).astype(cd)
        o_ref[...] = x * (c0.astype(cd) + c1.astype(cd) * t)


def _smu_small(flat, alpha, mu):
    # Tiny-input / ragged-tail path (< 128 elems): plain jnp outside the kernel.
    a = alpha[0].astype(jnp.float32)
    m = mu[0].astype(jnp.float32)
    xf = flat.astype(jnp.float32)
    y = xf * (0.5 * (1.0 + a) + 0.5 * (1.0 - a) * jax.lax.erf(m * (1.0 - a) * xf))
    return y.astype(flat.dtype)


def _smu_2d(x2d, alpha, mu, tile_rows):
    rows, width = x2d.shape
    grid = (pl.cdiv(rows, tile_rows),)
    return pl.pallas_call(
        smu_kernel,
        out_shape=jax.ShapeDtypeStruct((rows, width), x2d.dtype),
        grid_spec=pltpu.PrefetchScalarGridSpec(
            num_scalar_prefetch=0,
            grid=grid,
            in_specs=[
                pl.BlockSpec(memory_space=pltpu.SMEM),  # alpha (1,)
                pl.BlockSpec(memory_space=pltpu.SMEM),  # mu    (1,)
                pl.BlockSpec((tile_rows, width), lambda i: (i, 0)),
            ],
            out_specs=pl.BlockSpec((tile_rows, width), lambda i: (i, 0)),
        ),
        compiler_params=pltpu.CompilerParams(
            dimension_semantics=("parallel",),
            vmem_limit_bytes=VMEM_LIMIT_BYTES,
        ),
    )(alpha.astype(jnp.float32), mu.astype(jnp.float32), x2d)


def smu_pallas(x, alpha, mu):
    """x: any-shape float array (e.g. NCHW). alpha, mu: shape (1,) float32."""
    orig_shape = x.shape
    orig_dtype = x.dtype

    if orig_dtype in (jnp.float32, jnp.bfloat16, jnp.float16):
        io_dtype = orig_dtype
    else:
        # TODO(synk): non-{f32,bf16,f16} inputs go through an f32 compute pass
        # (matches the f32 reference, not torch float64 precision).
        io_dtype = jnp.float32

    flat = x.reshape(-1)
    if flat.dtype != io_dtype:
        flat = flat.astype(io_dtype)
    n = flat.shape[0]

    # Tiny inputs: not worth a kernel launch.
    if n < LANE:
        out = _smu_small(flat, alpha, mu)
        return out.reshape(orig_shape).astype(orig_dtype)

    # Pick a lane-dense width that divides n -> no padding pass needed.
    if n % 512 == 0:
        width = 512
    elif n % 256 == 0:
        width = 256
    else:
        width = 128

    main_n = (n // width) * width
    tail_n = n - main_n  # < 128 elems, only possible when width == 128

    main = flat if tail_n == 0 else flat[:main_n]
    rows = main_n // width
    x2d = main.reshape(rows, width)

    itemsize = np.dtype(io_dtype).itemsize
    # Native sublane packing granularity (8 for f32, 16 for bf16/f16).
    sub = SUBLANE * (4 // itemsize)

    if rows <= 2 * sub:
        # Single block covering the full slab (block == array dims is legal
        # even when rows isn't a multiple of the sublane packing).
        tile_rows = rows
    else:
        tile_rows_cap = max(sub, (TARGET_BLOCK_BYTES // (width * itemsize)) // sub * sub)
        tile_rows = min(tile_rows_cap,
                        _round_up(pl.cdiv(rows, MIN_GRID_STEPS), sub))

    out = _smu_2d(x2d, alpha, mu, tile_rows).reshape(-1)

    if tail_n:
        # Ragged tail computed outside the kernel instead of padding + slicing
        # the whole tensor (saves ~2x HBM traffic on non-divisible sizes).
        tail = _smu_small(flat[main_n:], alpha, mu)
        out = jnp.concatenate([out, tail])

    out = out.reshape(orig_shape)
    if out.dtype != orig_dtype:
        out = out.astype(orig_dtype)
    return out


def smu_ref(x, alpha, mu):
    a = alpha[0].astype(jnp.float32)
    m = mu[0].astype(jnp.float32)
    xf = x.astype(jnp.float32)
    y = ((1.0 + a) * xf + (1.0 - a) * xf * jax.lax.erf(m * (1.0 - a) * xf)) / 2.0
    return y.astype(x.dtype)


if __name__ == "__main__":
    key = jax.random.PRNGKey(0)

    # Deterministic parameters matching nn.Parameter defaults in __init__.
    alpha = jnp.array([0.25], dtype=jnp.float32)
    mu = jnp.array([1000000.0], dtype=jnp.float32)

    # Small NCHW input (module-consistent shape) -> single-block path.
    x_small = jax.random.normal(key, (2, 4, 16, 16), dtype=jnp.float32)
    y_small = smu_pallas(x_small, alpha, mu)
    jax.block_until_ready(y_small)
    assert y_small.shape == x_small.shape and y_small.dtype == x_small.dtype
    assert jnp.allclose(y_small, smu_ref(x_small, alpha, mu), atol=1e-5, rtol=1e-5), \
        "small-input mismatch vs reference"

    # Larger evenly-tiling input -> multi-step pipelined path (no pad / slice).
    x_big = jax.random.normal(jax.random.PRNGKey(1), (8, 16, 64, 64),
                              dtype=jnp.float32)
    y_big = smu_pallas(x_big, alpha, mu)
    jax.block_until_ready(y_big)
    assert y_big.shape == x_big.shape and y_big.dtype == x_big.dtype
    assert jnp.allclose(y_big, smu_ref(x_big, alpha, mu), atol=1e-5, rtol=1e-5), \
        "big-input mismatch vs reference"

    # Ragged size (not a multiple of 128): partial last block + tiny jnp tail.
    x_odd = jax.random.normal(jax.random.PRNGKey(2), (3, 5, 17, 19),
                              dtype=jnp.float32)
    y_odd = smu_pallas(x_odd, alpha, mu)
    jax.block_until_ready(y_odd)
    assert y_odd.shape == x_odd.shape
    assert jnp.allclose(y_odd, smu_ref(x_odd, alpha, mu), atol=1e-5, rtol=1e-5), \
        "odd-size mismatch vs reference"

    # bf16 stays bf16 across HBM; narrow-dtype math inside the kernel.
    x_bf16 = x_big.astype(jnp.bfloat16)
    y_bf16 = smu_pallas(x_bf16, alpha, mu)
    jax.block_until_ready(y_bf16)
    assert y_bf16.dtype == jnp.bfloat16
    assert jnp.allclose(y_bf16.astype(jnp.float32),
                        smu_ref(x_bf16, alpha, mu).astype(jnp.float32),
                        atol=2e-2, rtol=2e-2), "bf16 mismatch vs reference"

    print("KERNEL_OK")
</pallas_src>

<mosaic_0001>
module attributes {stable_mosaic.version = 11 : i64} {
  func.func @smu_kernel(%arg0: i32, %arg1: memref<1xf32, #tpu.memory_space<smem>>, %arg2: memref<1xf32, #tpu.memory_space<smem>>, %arg3: memref<4x512xf32, #tpu.memory_space<vmem>>, %arg4: memref<4x512xf32, #tpu.memory_space<vmem>>) attributes {dimension_semantics = [#tpu.dimension_semantics<parallel>], iteration_bounds = array<i64: 1>, scalar_prefetch = 0 : i64, scratch_operands = 0 : i64, tpu.core_type = #tpu.core_type<tc>, window_params = [{transform_indices = @transform_0, window_bounds = array<i64: 1>}, {transform_indices = @transform_1, window_bounds = array<i64: 1>}, {transform_indices = @transform_2, window_bounds = array<i64: 4, 512>}, {transform_indices = @transform_3, window_bounds = array<i64: 4, 512>}]} {
    %c0 = arith.constant 0 : index
    %0 = memref.load %arg1[%c0] : memref<1xf32, #tpu.memory_space<smem>>
    %c0_0 = arith.constant 0 : index
    %1 = memref.load %arg2[%c0_0] : memref<1xf32, #tpu.memory_space<smem>>
    %cst = arith.constant 1.000000e+00 : f32
    %2 = arith.addf %cst, %0 : f32
    %cst_1 = arith.constant 5.000000e-01 : f32
    %3 = arith.mulf %cst_1, %2 : f32
    %cst_2 = arith.constant 1.000000e+00 : f32
    %4 = arith.subf %cst_2, %0 : f32
    %cst_3 = arith.constant 5.000000e-01 : f32
    %5 = arith.mulf %cst_3, %4 : f32
    %cst_4 = arith.constant 1.000000e+00 : f32
    %6 = arith.subf %cst_4, %0 : f32
    %7 = arith.mulf %1, %6 : f32
    %c0_5 = arith.constant 0 : index
    %c0_6 = arith.constant 0 : index
    %8 = vector.load %arg3[%c0_5, %c0_6] : memref<4x512xf32, #tpu.memory_space<vmem>>, vector<4x512xf32>
    %9 = vector.broadcast %7 : f32 to vector<4x512xf32>
    %10 = arith.mulf %9, %8 : vector<4x512xf32>
    %11 = math.erf %10 : vector<4x512xf32>
    %12 = vector.broadcast %5 : f32 to vector<4x512xf32>
    %13 = arith.mulf %12, %11 : vector<4x512xf32>
    %14 = vector.broadcast %3 : f32 to vector<4x512xf32>
    %15 = arith.addf %14, %13 : vector<4x512xf32>
    %16 = arith.mulf %8, %15 : vector<4x512xf32>
    %c0_7 = arith.constant 0 : index
    %c0_8 = arith.constant 0 : index
    %17 = vector.load %arg4[%c0_7, %c0_8] : memref<4x512xf32, #tpu.memory_space<vmem>>, vector<4x512xf32>
    tpu.vector_store %arg4[%c0_7, %c0_8], %16 {strides = array<i32>} : memref<4x512xf32, #tpu.memory_space<vmem>>, vector<4x512xf32>,
    return
  }
  func.func @transform_0(%arg0: i32) -> i32 {
    %c0_i32 = arith.constant 0 : i32
    %c0_i32_0 = arith.constant 0 : i32
    return %c0_i32 : i32
  }
  func.func @transform_1(%arg0: i32) -> i32 {
    %c0_i32 = arith.constant 0 : i32
    %c0_i32_0 = arith.constant 0 : i32
    return %c0_i32 : i32
  }
  func.func @transform_2(%arg0: i32) -> (i32, i32) {
    %c0_i32 = arith.constant 0 : i32
    %c0_i32_0 = arith.constant 0 : i32
    return %arg0, %c0_i32 : i32, i32
  }
  func.func @transform_3(%arg0: i32) -> (i32, i32) {
    %c0_i32 = arith.constant 0 : i32
    %c0_i32_0 = arith.constant 0 : i32
    return %arg0, %c0_i32 : i32, i32
  }
}

</mosaic_0001>

<llo_original>
// kernel: tpu_custom_call.1
$region0: #{tpu_custom_call.1}
  #allocation0 [shape = 'u32[]', space=smem, size = 0x4, offset = 0x4, fixed_abs, tag = 'smem constant byte address 0x4 - core index']
  #allocation1 [shape = 'u32[72,128]{1,0:T(1,128)}', space=vmem, size = 0x9000, scoped, tag = 'internal scratch']
  #allocation2 [shape = 'f32[1]{0:T(128)S(6)}', space=smem, size = 0x200, scoped, tag = 'scoped memory for tpu_custom_call.1']
  #allocation3 [shape = 'f32[1]{0:T(128)S(6)}', space=smem, size = 0x200, scoped, tag = 'scoped memory for tpu_custom_call.1']
  %s0 = inlined_call_operand.<no memory space> [shape: f32[1], index: 0, kind: input, shape index: {}]
  %s1 = inlined_call_operand.<no memory space> [shape: f32[1], index: 1, kind: input, shape index: {}]
  %s2 = inlined_call_operand.hbm [shape: f32[4,512], index: 2, kind: input, shape index: {}]
  %s3 = inlined_call_operand.hbm [shape: f32[4,512], index: 3, kind: output, shape index: {}]
  %s4 = sld [smem:[#allocation0]]
  $region26: #{tpu_custom_call.1} parent=0
    _
  %s6 = ssub.s32 1, %s4
  %s7 = scalar_select 0, %s6, %s4
  %8 = sst [smem:[#allocation2]] %s0
  %9 = sst [smem:[#allocation3]] %s1
  $region1: #{tpu_custom_call.1} parent=0
    #allocation4 [shape = 'u8[8192]{0}', space=vmem, size = 0x2000, scoped, tag = 'input window, operand 2, single buffered']
    #allocation5 [shape = 's32[1]{0}', space=sflag, size = 0x4, scoped, tag = 'scoped memory for tpu_custom_call.1']
    #allocation6 [shape = 's32[1]{0}', space=sflag, size = 0x4, scoped, tag = 'scoped memory for tpu_custom_call.1']
    #allocation7 [shape = 'u8[8192]{0}', space=vmem, size = 0x2000, scoped, tag = 'output window, operand 0, single buffered']
    %10 = vsyncpa [#allocation5], 0
    %11 = vsyncpa [#allocation6], 0
    // Predicated region
    $region2: #{tpu_custom_call.1} parent=1 // pred_check
      _
    $region3: #{tpu_custom_call.1} parent=1 // pred_check_branch
      %13 = sbr.rel (0) target = $region5
    $region4: #{tpu_custom_call.1} parent=1 // pred_region
      _
    $region5: #{tpu_custom_call.1} parent=1 // pred_fallthru
      _
    // Predicated region
    $region6: #{tpu_custom_call.1} parent=1 // pred_check
      _
    $region7: #{tpu_custom_call.1} parent=1 // pred_check_branch
      %15 = sbr.rel (0) target = $region9
    $region8: #{tpu_custom_call.1} parent=1 // pred_region
      _
    $region9: #{tpu_custom_call.1} parent=1 // pred_fallthru
      _
    // Predicated region
    $region10: #{tpu_custom_call.1} parent=1 // pred_check
      _
    $region11: #{tpu_custom_call.1} parent=1 // pred_check_branch
      %17 = sbr.rel (0) target = $region13
    $region12: #{tpu_custom_call.1} parent=1 // pred_region
      %19 = vsyncadd [#allocation5], 0
      %s21 = sshll.u32 %s2, 4
      %s22 = int_to_ptr.hbm [resolvable:$true] %s21
      %s23 = sshll.u32 [#allocation4], 4
      %s24 = int_to_ptr.vmem [resolvable:$true] %s23
      %26 = dma.hbm_to_vmem [thread:$0]  %s22, 256, %s24, [#allocation5]
    $region13: #{tpu_custom_call.1} parent=1 // pred_fallthru
      _
    // Predicated region
    $region14: #{tpu_custom_call.1} parent=1 // pred_check
      _
    $region15: #{tpu_custom_call.1} parent=1 // pred_check_branch
      %28 = sbr.rel (0) target = $region17
    $region16: #{tpu_custom_call.1} parent=1 // pred_region
      %30 = dma.done [#allocation5], 256
    $region17: #{tpu_custom_call.1} parent=1 // pred_fallthru
      _
    %s31 = sld [smem:[#allocation2]]
    %s32 = sld [smem:[#allocation3]]
    %s33 = sadd.f32 %s31, 1.0
    %s34 = smul.f32 %s33, 0.5
    %s35 = ssub.f32 1.0, %s31
    %s36 = smul.f32 %s35, 0.5
    %s37 = smul.f32 %s32, %s35
    %v38 = vld [vmem:[#allocation4] sm:$0xff]
    %v39 = vld [vmem:[#allocation4 + $0x8] sm:$0xff]
    %v40 = vstv %s37
    %v41 = vmul.f32 %v40, %v38
    %v42 = vmul.f32 %v40, %v39
    %v43 = vmul.f32 %v41, %v41
    %v44 = vmin.f32 16.0, %v43
    %v45 = vmul.f32 %v44, 2.1237322e-06
    %v46 = vadd.f32 %v45, 0.00028619796
    %v47 = vmul.f32 %v44, %v46
    %v48 = vadd.f32 %v47, 0.0036580483
    %v49 = vmul.f32 %v44, %v48
    %v50 = vadd.f32 %v49, 0.05243302
    %v51 = vmul.f32 %v44, %v50
    %v52 = vadd.f32 %v51, 0.18741608
    %v53 = vmul.f32 %v44, %v52
    %v54 = vadd.f32 %v53, 1.1283791
    %v55 = vmul.f32 %v41, %v54
    %v56 = vmul.f32 %v44, 3.8918573e-05
    %v57 = vadd.f32 %v56, 0.001143296
    %v58 = vmul.f32 %v44, %v57
    %v59 = vadd.f32 %v58, 0.014752088
    %v60 = vmul.f32 %v44, %v59
    %v61 = vadd.f32 %v60, 0.112945676
    %v62 = vmul.f32 %v44, %v61
    %v63 = vadd.f32 %v62, 0.4994258
    %v64 = vmul.f32 %v44, %v63
    %v65 = vadd.f32 %v64, 1.0
    %v66 = vrcp.pop %v65
    %v67 = vmul.f32 %v65, %v66
    %v68 = vsub.f32 1.0, %v67
    %v69 = vmul.f32 %v66, %v68
    %v70 = vadd.f32 %v66, %v69
    %vm71 = vweird.f32 %v65
    %vm72 = vweird.f32 %v66
    %vm73 = vmor %vm71, %vm72
    %v74 = vsel %vm73, %v66, %v70
    %v75 = vand.u32 2147483647, %v65
    %vm76 = vcmp.eq.f32.partialorder %v75, 8.507059e+37
    %v77 = vand.u32 %v65, 2147483648
    %v78 = vor.u32 1.1754944e-38, %v77
    %v79 = vsel %vm76, %v78, %v74
    %v80 = vmul.f32 %v55, %v79
    %v81 = vmin.f32 %v80, 1.0
    %v82 = vmax.f32 %v81, -1.0
    %v83 = vmul.f32 %v42, %v42
    %v84 = vmin.f32 16.0, %v83
    %v85 = vmul.f32 %v84, 2.1237322e-06
    %v86 = vadd.f32 %v85, 0.00028619796
    %v87 = vmul.f32 %v84, %v86
    %v88 = vadd.f32 %v87, 0.0036580483
    %v89 = vmul.f32 %v84, %v88
    %v90 = vadd.f32 %v89, 0.05243302
    %v91 = vmul.f32 %v84, %v90
    %v92 = vadd.f32 %v91, 0.18741608
    %v93 = vmul.f32 %v84, %v92
    %v94 = vadd.f32 %v93, 1.1283791
    %v95 = vmul.f32 %v42, %v94
    %v96 = vmul.f32 %v84, 3.8918573e-05
    %v97 = vadd.f32 %v96, 0.001143296
    %v98 = vmul.f32 %v84, %v97
    %v99 = vadd.f32 %v98, 0.014752088
    %v100 = vmul.f32 %v84, %v99
    %v101 = vadd.f32 %v100, 0.112945676
    %v102 = vmul.f32 %v84, %v101
    %v103 = vadd.f32 %v102, 0.4994258
    %v104 = vmul.f32 %v84, %v103
    %v105 = vadd.f32 %v104, 1.0
    %v106 = vrcp.pop %v105
    %v107 = vmul.f32 %v105, %v106
    %v108 = vsub.f32 1.0, %v107
    %v109 = vmul.f32 %v106, %v108
    %v110 = vadd.f32 %v106, %v109
    %vm111 = vweird.f32 %v105
    %vm112 = vweird.f32 %v106
    %vm113 = vmor %vm111, %vm112
    %v114 = vsel %vm113, %v106, %v110
    %v115 = vand.u32 2147483647, %v105
    %vm116 = vcmp.eq.f32.partialorder %v115, 8.507059e+37
    %v117 = vand.u32 %v105, 2147483648
    %v118 = vor.u32 1.1754944e-38, %v117
    %v119 = vsel %vm116, %v118, %v114
    %v120 = vmul.f32 %v95, %v119
    %v121 = vmin.f32 %v120, 1.0
    %v122 = vmax.f32 %v121, -1.0
    %v123 = vstv %s36
    %v124 = vmul.f32 %v123, %v82
    %v125 = vmul.f32 %v123, %v122
    %v126 = vstv %s34
    %v127 = vadd.f32 %v126, %v124
    %v128 = vadd.f32 %v126, %v125
    %v129 = vmul.f32 %v38, %v127
    %v130 = vmul.f32 %v39, %v128
    %131 = vst [vmem:[#allocation7] sm:$0xff] %v129
    %132 = vst [vmem:[#allocation7 + $0x8] sm:$0xff] %v130
    // Predicated region
    $region18: #{tpu_custom_call.1} parent=1 // pred_check
      _
    $region19: #{tpu_custom_call.1} parent=1 // pred_check_branch
      %134 = sbr.rel (0) target = $region21
    $region20: #{tpu_custom_call.1} parent=1 // pred_region
      %136 = vsyncadd [#allocation6], 0
      %s138 = sshll.u32 [#allocation7], 4
      %s139 = int_to_ptr.vmem [resolvable:$true] %s138
      %s140 = sshll.u32 %s3, 4
      %s141 = int_to_ptr.hbm [resolvable:$true] %s140
      %143 = dma.vmem_to_hbm [thread:$0]  %s139, 256, %s141, [#allocation6]
    $region21: #{tpu_custom_call.1} parent=1 // pred_fallthru
      _
    // Predicated region
    $region22: #{tpu_custom_call.1} parent=1 // pred_check
      _
    $region23: #{tpu_custom_call.1} parent=1 // pred_check_branch
      %145 = sbr.rel (0) target = $region25
    $region24: #{tpu_custom_call.1} parent=1 // pred_region
      %147 = dma.done [#allocation6], 256
    $region25: #{tpu_custom_call.1} parent=1 // pred_fallthru
      _
    %148 = vsyncpa [#allocation5], 1
    %149 = vsyncpa [#allocation6], 1

</llo_original>
